<compile_context>
chip_gen: v6e
topology: v6e:2x2x1
jax: 0.10.0
libtpu: 0.0.40
codegen_flags: <defaults>
</compile_context>

<pallas_src>
from typing import Dict, List, Optional

import jax
import jax.numpy as jnp
from jax.experimental import pallas as pl
from jax.experimental.pallas import tpu as pltpu


# ---------------------------------------------------------------------------
# Kernel
# ---------------------------------------------------------------------------
def _condition_embed_kernel(cond_ref, w_ref, b_ref, out_ref):
    # cond_ref: (TB, 1), w_ref: (1, F), b_ref: (1, F), out_ref: (TB, F)
    cond = cond_ref[...].astype(jnp.float32)   # (TB, 1)
    w = w_ref[...].astype(jnp.float32)         # (1, F)
    b = b_ref[...].astype(jnp.float32)         # (1, F)
    # Broadcast affine embedding on the VPU: out[t, f] = cond[t, 0]*w[0, f]+b[0, f]
    # (deliberately NOT a (TB,1)@(1,F) matmul -- this op is HBM-bound, the MXU
    #  would only add drain latency).
    out_ref[...] = (cond * w + b).astype(out_ref.dtype)


def _round_up(x: int, m: int) -> int:
    return ((x + m - 1) // m) * m


def _choose_block_b(b_pad: int, f_pad: int,
                    max_tile_bytes: int = 4 * 1024 * 1024,
                    target_rows: int = 512) -> int:
    """Pick a batch-tile size: aim for >=512 rows, cap tile bytes for v7x VMEM."""
    rows_by_bytes = max(8, (max_tile_bytes // (f_pad * 4)) // 8 * 8)
    tb = min(target_rows, rows_by_bytes, b_pad)
    return max(8, tb // 8 * 8)


# ---------------------------------------------------------------------------
# Pallas-backed forward
# ---------------------------------------------------------------------------
def condition_embedding_forward(cond: jax.Array, weight: jax.Array,
                                bias: jax.Array,
                                out_dtype=jnp.float32) -> jax.Array:
    """cond: (B, 1) f32, weight: (1, F), bias: (1, F) -> (B, F) out_dtype."""
    B = cond.shape[0]
    F = weight.shape[1]

    # Lane-dense feature axis (multiple of 128) -> unmasked vector stores.
    f_pad = _round_up(F, 128)
    # Batch tile, then pad batch to a whole number of tiles.
    tb = _choose_block_b(_round_up(B, 8), f_pad)
    b_pad = _round_up(B, tb)

    cond_p = cond.astype(jnp.float32)
    if b_pad != B:
        cond_p = jnp.pad(cond_p, ((0, b_pad - B), (0, 0)))
    w_p = weight.astype(jnp.float32)
    b_p = bias.astype(jnp.float32)
    if f_pad != F:
        w_p = jnp.pad(w_p, ((0, 0), (0, f_pad - F)))
        b_p = jnp.pad(b_p, ((0, 0), (0, f_pad - F)))

    grid = (b_pad // tb,)

    out = pl.pallas_call(
        _condition_embed_kernel,
        out_shape=jax.ShapeDtypeStruct((b_pad, f_pad), out_dtype),
        grid_spec=pl.GridSpec(
            grid=grid,
            in_specs=[
                pl.BlockSpec((tb, 1), lambda i: (i, 0)),      # cond: batch-tiled
                pl.BlockSpec((1, f_pad), lambda i: (0, 0)),   # weight: resident
                pl.BlockSpec((1, f_pad), lambda i: (0, 0)),   # bias: resident
            ],
            out_specs=pl.BlockSpec((tb, f_pad), lambda i: (i, 0)),
        ),
        compiler_params=pltpu.CompilerParams(
            dimension_semantics=("parallel",),     # independent batch tiles
            vmem_limit_bytes=32 * 1024 * 1024,     # explicit; tiles capped ~4 MiB
        ),
    )(cond_p, w_p, b_p)

    if b_pad != B or f_pad != F:
        out = out[:B, :F]
    return out


# ---------------------------------------------------------------------------
# Module mirror
# ---------------------------------------------------------------------------
class ConditionEmbedding:
    """JAX mirror of concdvae ConditionEmbedding (abstract torch base class)."""

    # Below one vreg-ish of output, the pallas_call launch/DMA overhead dwarfs
    # the work; fall back to fused XLA elementwise.
    _PALLAS_MIN_ELEMENTS = 8 * 128

    def __init__(self, condition_name: str, n_features: int,
                 required_data_properties: Optional[List[str]] = None,
                 condition_type: str = "trajectory"):
        if condition_type not in ["trajectory", "step", "atom"]:
            raise ValueError(
                f"`condition_type` is {condition_type} but needs to be "
                f"`trajectory`, `step`, or `atom` for trajectory-wise, "
                f"step-wise, or atom-wise conditions, respectively.")
        self.condition_name = condition_name
        self.condition_type = condition_type
        self.n_features = n_features
        self.required_data_properties = (
            [] if required_data_properties is None else required_data_properties)

        # TODO(synk): the base-class forward() raises NotImplementedError in
        # PyTorch; the affine scalar->n_features embedding below is a
        # representative concrete forward, not a translation of abstract code.
        k = jax.random.PRNGKey(0)
        kw, kb = jax.random.split(k)
        self.weight = jax.random.normal(kw, (1, n_features), jnp.float32) * 0.02
        self.bias = jax.random.normal(kb, (1, n_features), jnp.float32) * 0.02

    def forward(self, inputs: Dict[str, jax.Array],
                out_dtype=jnp.float32) -> jax.Array:
        cond = inputs[self.condition_name]
        cond = jnp.reshape(cond.astype(jnp.float32), (-1, 1))   # (B, 1)
        B = cond.shape[0]
        if B * self.n_features < self._PALLAS_MIN_ELEMENTS:
            # Tiny: let XLA fuse the elementwise op (faster than kernel launch).
            return (cond * self.weight + self.bias).astype(out_dtype)
        return condition_embedding_forward(cond, self.weight, self.bias,
                                           out_dtype=out_dtype)

    __call__ = forward


# ---------------------------------------------------------------------------
# Demo / correctness check
# ---------------------------------------------------------------------------
if __name__ == "__main__":
    B = 64            # batch (big enough to exercise the Pallas path)
    N_FEATURES = 96   # deliberately NOT a multiple of 128 -> exercises padding

    key = jax.random.PRNGKey(0)
    cond_vals = jax.random.normal(key, (B,), jnp.float32)

    module = ConditionEmbedding(
        condition_name="band_gap",
        n_features=N_FEATURES,
        required_data_properties=["band_gap"],
        condition_type="trajectory",
    )

    out = module({"band_gap": cond_vals})
    out = jax.block_until_ready(out)

    # Reference check (plain JAX) for the affine embedding.
    ref = cond_vals.reshape(-1, 1) * module.weight + module.bias
    assert out.shape == (B, N_FEATURES), out.shape
    assert jnp.allclose(out, ref, atol=1e-6), "mismatch vs reference"

    # Also exercise the kernel directly at a lane-aligned width (128) to make
    # sure the unpadded path runs too.
    module2 = ConditionEmbedding("band_gap", 128, ["band_gap"], "trajectory")
    out2 = jax.block_until_ready(module2({"band_gap": cond_vals}))
    ref2 = cond_vals.reshape(-1, 1) * module2.weight + module2.bias
    assert out2.shape == (B, 128)
    assert jnp.allclose(out2, ref2, atol=1e-6), "mismatch vs reference (F=128)"

    print("KERNEL_OK")
</pallas_src>

<mosaic_0001>
module attributes {stable_mosaic.version = 11 : i64} {
  func.func @_condition_embed_kernel(%arg0: i32, %arg1: memref<64x1xf32, #tpu.memory_space<vmem>>, %arg2: memref<1x128xf32, #tpu.memory_space<vmem>>, %arg3: memref<1x128xf32, #tpu.memory_space<vmem>>, %arg4: memref<64x128xf32, #tpu.memory_space<vmem>>) attributes {dimension_semantics = [#tpu.dimension_semantics<parallel>], iteration_bounds = array<i64: 1>, scalar_prefetch = 0 : i64, scratch_operands = 0 : i64, tpu.core_type = #tpu.core_type<tc>, window_params = [{transform_indices = @transform_0, window_bounds = array<i64: 64, 1>}, {pipeline_mode = #tpu.pipeline_mode<synchronous>, transform_indices = @transform_1, window_bounds = array<i64: 1, 128>}, {pipeline_mode = #tpu.pipeline_mode<synchronous>, transform_indices = @transform_2, window_bounds = array<i64: 1, 128>}, {transform_indices = @transform_3, window_bounds = array<i64: 64, 128>}]} {
    %c0 = arith.constant 0 : index
    %c0_0 = arith.constant 0 : index
    %0 = vector.load %arg1[%c0, %c0_0] : memref<64x1xf32, #tpu.memory_space<vmem>>, vector<64x1xf32>
    %c0_1 = arith.constant 0 : index
    %c0_2 = arith.constant 0 : index
    %1 = vector.load %arg2[%c0_1, %c0_2] : memref<1x128xf32, #tpu.memory_space<vmem>>, vector<1x128xf32>
    %c0_3 = arith.constant 0 : index
    %c0_4 = arith.constant 0 : index
    %2 = vector.load %arg3[%c0_3, %c0_4] : memref<1x128xf32, #tpu.memory_space<vmem>>, vector<1x128xf32>
    %3 = vector.broadcast %0 : vector<64x1xf32> to vector<64x128xf32>
    %4 = vector.broadcast %1 : vector<1x128xf32> to vector<64x128xf32>
    %5 = arith.mulf %3, %4 : vector<64x128xf32>
    %6 = vector.broadcast %2 : vector<1x128xf32> to vector<64x128xf32>
    %7 = arith.addf %5, %6 : vector<64x128xf32>
    %c0_5 = arith.constant 0 : index
    %c0_6 = arith.constant 0 : index
    %8 = vector.load %arg4[%c0_5, %c0_6] : memref<64x128xf32, #tpu.memory_space<vmem>>, vector<64x128xf32>
    tpu.vector_store %arg4[%c0_5, %c0_6], %7 {strides = array<i32>} : memref<64x128xf32, #tpu.memory_space<vmem>>, vector<64x128xf32>,
    return
  }
  func.func @transform_0(%arg0: i32) -> (i32, i32) {
    %c0_i32 = arith.constant 0 : i32
    %c0_i32_0 = arith.constant 0 : i32
    return %arg0, %c0_i32 : i32, i32
  }
  func.func @transform_1(%arg0: i32) -> (i32, i32) {
    %c0_i32 = arith.constant 0 : i32
    %c0_i32_0 = arith.constant 0 : i32
    %c0_i32_1 = arith.constant 0 : i32
    return %c0_i32, %c0_i32_0 : i32, i32
  }
  func.func @transform_2(%arg0: i32) -> (i32, i32) {
    %c0_i32 = arith.constant 0 : i32
    %c0_i32_0 = arith.constant 0 : i32
    %c0_i32_1 = arith.constant 0 : i32
    return %c0_i32, %c0_i32_0 : i32, i32
  }
  func.func @transform_3(%arg0: i32) -> (i32, i32) {
    %c0_i32 = arith.constant 0 : i32
    %c0_i32_0 = arith.constant 0 : i32
    return %arg0, %c0_i32 : i32, i32
  }
}

</mosaic_0001>

<llo_original>
// kernel: tpu_custom_call.1
$region0: #{tpu_custom_call.1}
  #allocation0 [shape = 'u32[]', space=smem, size = 0x4, offset = 0x4, fixed_abs, tag = 'smem constant byte address 0x4 - core index']
  #allocation1 [shape = 'u32[144,128]{1,0:T(1,128)}', space=vmem, size = 0x12000, scoped, tag = 'internal scratch']
  %s0 = inlined_call_operand.vmem [shape: f32[64,1], index: 0, kind: input, shape index: {}]
  %s1 = inlined_call_operand.vmem [shape: f32[1,128], index: 1, kind: input, shape index: {}]
  %s2 = inlined_call_operand.vmem [shape: f32[1,128], index: 2, kind: input, shape index: {}]
  %s3 = inlined_call_operand.hbm [shape: f32[64,128], index: 3, kind: output, shape index: {}]
  %s4 = sld [smem:[#allocation0]]
  $region22: #{tpu_custom_call.1} parent=0
    _
  %s6 = ssub.s32 1, %s4
  %s7 = scalar_select 0, %s6, %s4
  $region1: #{tpu_custom_call.1} parent=0
    #allocation2 [shape = 'u8[32768]{0}', space=vmem, size = 0x8000, scoped, tag = 'output window, operand 0, single buffered']
    #allocation3 [shape = 's32[1]{0}', space=sflag, size = 0x4, scoped, tag = 'scoped memory for tpu_custom_call.1']
    %8 = vsyncpa [#allocation3], 0
    // Predicated region
    $region2: #{tpu_custom_call.1} parent=1 // pred_check
      _
    $region3: #{tpu_custom_call.1} parent=1 // pred_check_branch
      %10 = sbr.rel (0) target = $region5
    $region4: #{tpu_custom_call.1} parent=1 // pred_region
      _
    $region5: #{tpu_custom_call.1} parent=1 // pred_fallthru
      _
    // Predicated region
    $region6: #{tpu_custom_call.1} parent=1 // pred_check
      _
    $region7: #{tpu_custom_call.1} parent=1 // pred_check_branch
      %12 = sbr.rel (0) target = $region9
    $region8: #{tpu_custom_call.1} parent=1 // pred_region
      _
    $region9: #{tpu_custom_call.1} parent=1 // pred_fallthru
      _
    // Predicated region
    $region10: #{tpu_custom_call.1} parent=1 // pred_check
      _
    $region11: #{tpu_custom_call.1} parent=1 // pred_check_branch
      %14 = sbr.rel (0) target = $region13
    $region12: #{tpu_custom_call.1} parent=1 // pred_region
      _
    $region13: #{tpu_custom_call.1} parent=1 // pred_fallthru
      _
    %v15 = vld [vmem:[%s0] sm:$0xff]
    %v16 = vld [vmem:[%s0 + $0x8] sm:$0xff]
    %v17 = vld [vmem:[%s0 + $0x10] sm:$0xff]
    %v18 = vld [vmem:[%s0 + $0x18] sm:$0xff]
    %v19 = vld [vmem:[%s0 + $0x20] sm:$0xff]
    %v20 = vld [vmem:[%s0 + $0x28] sm:$0xff]
    %v21 = vld [vmem:[%s0 + $0x30] sm:$0xff]
    %v22 = vld [vmem:[%s0 + $0x38] sm:$0xff]
    %v23 = vld [vmem:[%s1] sm:$0x1]
    %v24 = vld [vmem:[%s2] sm:$0x1]
    %26 = vset.pattern.permute.xlu0 0
    %27 = vperm.xlu0 %26, %v15
    %v28 = vpop.permute.xlu0 %27
    %31 = vset.pattern.permute.xlu0 0
    %32 = vperm.xlu0 %31, %v16
    %v33 = vpop.permute.xlu0 %32
    %36 = vset.pattern.permute.xlu0 0
    %37 = vperm.xlu0 %36, %v17
    %v38 = vpop.permute.xlu0 %37
    %41 = vset.pattern.permute.xlu0 0
    %42 = vperm.xlu0 %41, %v18
    %v43 = vpop.permute.xlu0 %42
    %46 = vset.pattern.permute.xlu0 0
    %47 = vperm.xlu0 %46, %v19
    %v48 = vpop.permute.xlu0 %47
    %51 = vset.pattern.permute.xlu0 0
    %52 = vperm.xlu0 %51, %v20
    %v53 = vpop.permute.xlu0 %52
    %56 = vset.pattern.permute.xlu0 0
    %57 = vperm.xlu0 %56, %v21
    %v58 = vpop.permute.xlu0 %57
    %61 = vset.pattern.permute.xlu0 0
    %62 = vperm.xlu0 %61, %v22
    %v63 = vpop.permute.xlu0 %62
    %v66 = vlaneseq
    %v67 = vshrl.u32 %v66, 7
    %v68 = vsub.s32 0, %v67
    %v69 = vrot.slane %v23, %v68
    %v71 = vmul.f32 %v28, %v69
    %v72 = vmul.f32 %v33, %v69
    %v73 = vmul.f32 %v38, %v69
    %v74 = vmul.f32 %v43, %v69
    %v75 = vmul.f32 %v48, %v69
    %v76 = vmul.f32 %v53, %v69
    %v77 = vmul.f32 %v58, %v69
    %v78 = vmul.f32 %v63, %v69
    %v80 = vlaneseq
    %v81 = vshrl.u32 %v80, 7
    %v82 = vsub.s32 0, %v81
    %v83 = vrot.slane %v24, %v82
    %v85 = vadd.f32 %v71, %v83
    %v86 = vadd.f32 %v72, %v83
    %v87 = vadd.f32 %v73, %v83
    %v88 = vadd.f32 %v74, %v83
    %v89 = vadd.f32 %v75, %v83
    %v90 = vadd.f32 %v76, %v83
    %v91 = vadd.f32 %v77, %v83
    %v92 = vadd.f32 %v78, %v83
    %93 = vst [vmem:[#allocation2] sm:$0xff] %v85
    %94 = vst [vmem:[#allocation2 + $0x8] sm:$0xff] %v86
    %95 = vst [vmem:[#allocation2 + $0x10] sm:$0xff] %v87
    %96 = vst [vmem:[#allocation2 + $0x18] sm:$0xff] %v88
    %97 = vst [vmem:[#allocation2 + $0x20] sm:$0xff] %v89
    %98 = vst [vmem:[#allocation2 + $0x28] sm:$0xff] %v90
    %99 = vst [vmem:[#allocation2 + $0x30] sm:$0xff] %v91
    %100 = vst [vmem:[#allocation2 + $0x38] sm:$0xff] %v92
    // Predicated region
    $region14: #{tpu_custom_call.1} parent=1 // pred_check
      _
    $region15: #{tpu_custom_call.1} parent=1 // pred_check_branch
      %102 = sbr.rel (0) target = $region17
    $region16: #{tpu_custom_call.1} parent=1 // pred_region
      %s104 = ssub.s32 1024, 1024
      %105 = vsyncadd [#allocation3], %s104
      %s106 = sshll.u32 [#allocation2], 4
      %s107 = int_to_ptr.vmem [resolvable:$true] %s106
      %112 = dma.vmem_to_hbm [thread:$0]  %s107, 1024, %s3, [#allocation3], 128, 128, 8
    $region17: #{tpu_custom_call.1} parent=1 // pred_fallthru
      _
    // Predicated region
    $region18: #{tpu_custom_call.1} parent=1 // pred_check
      _
    $region19: #{tpu_custom_call.1} parent=1 // pred_check_branch
      %114 = sbr.rel (0) target = $region21
    $region20: #{tpu_custom_call.1} parent=1 // pred_region
      %115 = dma.done [#allocation3], 1024
    $region21: #{tpu_custom_call.1} parent=1 // pred_fallthru
      _
    %116 = vsyncpa [#allocation3], 1

</llo_original>
